<compile_context>
chip_gen: v6e
topology: v6e:2x2x1
jax: 0.10.0
libtpu: 0.0.40
codegen_flags: <defaults>
</compile_context>

<pallas_src>
import functools

import jax
import jax.numpy as jnp
from jax.experimental import pallas as pl
from jax.experimental.pallas import tpu as pltpu

_TM_CAP, _TK_CAP, _TN_CAP = 256, 1024, 512      # tile caps (v5e/v6e/v7x safe)
_VMEM_LIMIT = 32 * 1024 * 1024                  # scoped VMEM request (v7x-safe)
_FUSED_FWD_BUDGET = 16 * 1024 * 1024            # whole-forward-in-VMEM gate
_FUSED_LAYER_BUDGET = 24 * 1024 * 1024          # per-layer resident-XW gate


def _round_up(x, m):
    return ((x + m - 1) // m) * m


def _pad2(x, shape):
    pads = tuple((0, t - s) for s, t in zip(x.shape, shape))
    if all(p == (0, 0) for p in pads):
        return x
    return jnp.pad(x, pads)


# ---------------------------------------------------------------------------
# Kernel 1: fully fused forward (small problems; everything resident in VMEM).
# ---------------------------------------------------------------------------
def _fused_forward_kernel(*refs, num_layers):
    a_ref, x_ref = refs[0], refs[1]
    layer_refs = refs[2:2 + 2 * num_layers]
    w_lin_ref = refs[2 + 2 * num_layers]
    b_lin_ref = refs[3 + 2 * num_layers]
    o_ref = refs[4 + 2 * num_layers]

    a = a_ref[...]
    h = x_ref[...]
    for layer in range(num_layers):
        w = layer_refs[2 * layer][...]
        b = layer_refs[2 * layer + 1][...]
        xw = jnp.dot(h, w, preferred_element_type=jnp.float32)          # X @ W
        h = jnp.maximum(jnp.dot(a, xw, preferred_element_type=jnp.float32) + b,
                        0.0)                                            # GCN+ReLU
    # F.dropout(p=0.5, training=False) == identity in eval mode.
    o_ref[...] = (jnp.dot(h, w_lin_ref[...], preferred_element_type=jnp.float32)
                  + b_lin_ref[...]).astype(o_ref.dtype)


def _fused_forward_fits(n, f, hidden, c, budget=_FUSED_FWD_BUDGET):
    np_ = _round_up(n, 8)
    dims = [_round_up(d, 128) for d in [f] + list(hidden) + [c]]
    total = np_ * np_ * 4 + np_ * dims[0] * 4
    for i in range(len(dims) - 1):
        total += dims[i] * dims[i + 1] * 4 + dims[i + 1] * 4
    total += np_ * dims[-1] * 4            # output
    total += 3 * np_ * max(dims) * 4       # live-intermediate headroom
    return total <= budget


def _forward_fused_whole(params, x, a_hat):
    """Single pallas_call for the whole forward; f32 throughout."""
    n, f = x.shape
    np_ = _round_up(n, 8)                       # sublane multiple only, NOT 128
    a_p = _pad2(a_hat.astype(jnp.float32), (np_, np_))
    x_p = _pad2(x.astype(jnp.float32), (np_, _round_up(f, 128)))
    inputs = [a_p, x_p]
    prev = x_p.shape[1]
    for w, b in params["gcn"]:
        fout = w.shape[1]
        hp = _round_up(fout, 128)
        inputs.append(_pad2(w.astype(jnp.float32), (prev, hp)))
        inputs.append(_pad2(b.astype(jnp.float32).reshape(1, fout), (1, hp)))
        prev = hp
    w_lin, b_lin = params["linear"]
    c = w_lin.shape[1]
    cp = _round_up(c, 128)
    inputs.append(_pad2(w_lin.astype(jnp.float32), (prev, cp)))
    inputs.append(_pad2(b_lin.astype(jnp.float32).reshape(1, c), (1, cp)))

    kernel = functools.partial(_fused_forward_kernel,
                               num_layers=len(params["gcn"]))
    out = pl.pallas_call(
        kernel,
        out_shape=jax.ShapeDtypeStruct((np_, cp), jnp.float32),
        in_specs=[pl.BlockSpec(memory_space=pltpu.MemorySpace.VMEM)] * len(inputs),
        out_specs=pl.BlockSpec(memory_space=pltpu.MemorySpace.VMEM),
        compiler_params=pltpu.CompilerParams(vmem_limit_bytes=_VMEM_LIMIT),
    )(*inputs)
    return out[:n, :c]


# ---------------------------------------------------------------------------
# Kernel 2: fused GCN layer  relu(A_hat @ (X @ W) + b)  for large problems.
# Grid = (J over H column tiles [parallel], I over node row tiles [arbitrary]).
# X@W[:, j-tile] is computed once per j (at i == 0) into a VMEM scratch and
# reused for every A_hat row tile -> no HBM intermediate, no recomputation.
# ---------------------------------------------------------------------------
def _gcn_layer_fused_kernel(a_ref, x_ref, w_ref, b_ref, o_ref, xw_ref):
    i = pl.program_id(1)

    @pl.when(i == 0)
    def _compute_xw():
        xw_ref[...] = jnp.dot(x_ref[...], w_ref[...],
                              preferred_element_type=jnp.float32
                              ).astype(xw_ref.dtype)

    acc = jnp.dot(a_ref[...], xw_ref[...], preferred_element_type=jnp.float32)
    o_ref[...] = jnp.maximum(acc + b_ref[...], 0.0).astype(o_ref.dtype)


def gcn_layer_fused(a_p, x_p, w_p, b_p, *, tm, tn, out_dtype=jnp.bfloat16):
    mp, np_ = a_p.shape
    np2, fp = x_p.shape
    fp2, hp = w_p.shape
    assert np_ == np2 and fp == fp2
    grid = (hp // tn, mp // tm)   # (j, i)
    return pl.pallas_call(
        _gcn_layer_fused_kernel,
        out_shape=jax.ShapeDtypeStruct((mp, hp), out_dtype),
        grid_spec=pltpu.PrefetchScalarGridSpec(
            num_scalar_prefetch=0,
            grid=grid,
            in_specs=[
                pl.BlockSpec((tm, np_), lambda j, i: (i, 0)),   # A_hat row slab
                pl.BlockSpec((np_, fp), lambda j, i: (0, 0)),   # X resident
                pl.BlockSpec((fp, tn), lambda j, i: (0, j)),    # W column tile
                pl.BlockSpec((1, tn), lambda j, i: (0, j)),     # bias tile
            ],
            out_specs=pl.BlockSpec((tm, tn), lambda j, i: (i, j)),
            scratch_shapes=[pltpu.VMEM((np_, tn), jnp.bfloat16)],  # resident XW
        ),
        # j is independent (megacore-parallel on v7x); i must be sequential so
        # that the i==0 XW compute precedes the reuse.
        compiler_params=pltpu.CompilerParams(
            dimension_semantics=("parallel", "arbitrary"),
            vmem_limit_bytes=_VMEM_LIMIT),
    )(a_p, x_p, w_p, b_p)


def _layer_fused_fits(np_, fp, hp, tm, tn, budget=_FUSED_LAYER_BUDGET):
    bpe = 2  # bf16
    total = 2 * np_ * fp * bpe       # X (double-buffered worst case)
    total += 2 * fp * tn * bpe       # W column tile
    total += np_ * tn * bpe          # XW scratch
    total += 2 * tm * np_ * bpe      # A_hat row slab
    total += 2 * tm * tn * bpe       # output tile
    total += 2 * tn * 4              # bias
    return total <= budget


# ---------------------------------------------------------------------------
# Kernel 3: general tiled matmul  out = [relu](A @ B [+ bias])
#   - single-K variant: no accumulator scratch, direct write (+ static bias)
#   - multi-K variant : f32 VMEM accumulator, init/finalize via pl.when
# ---------------------------------------------------------------------------
def _mm_kernel_single_k(a_ref, b_ref, *rest, relu, has_bias):
    if has_bias:
        bias_ref, o_ref = rest
    else:
        (o_ref,) = rest
    out = jnp.dot(a_ref[...], b_ref[...], preferred_element_type=jnp.float32)
    if has_bias:
        out = out + bias_ref[...]
    if relu:
        out = jnp.maximum(out, 0.0)
    o_ref[...] = out.astype(o_ref.dtype)


def _mm_kernel_multi_k(a_ref, b_ref, *rest, relu, has_bias):
    if has_bias:
        bias_ref, o_ref, acc_ref = rest
    else:
        o_ref, acc_ref = rest
    k = pl.program_id(2)

    @pl.when(k == 0)
    def _init():
        acc_ref[...] = jnp.zeros_like(acc_ref)

    acc_ref[...] += jnp.dot(a_ref[...], b_ref[...],
                            preferred_element_type=jnp.float32)

    @pl.when(k == pl.num_programs(2) - 1)
    def _finalize():
        out = acc_ref[...]
        if has_bias:
            out = out + bias_ref[...]
        if relu:
            out = jnp.maximum(out, 0.0)
        o_ref[...] = out.astype(o_ref.dtype)


def pallas_matmul(a, b, bias=None, *, relu=False, out_dtype=jnp.float32,
                  compute_dtype=jnp.bfloat16):
    m, k = a.shape
    k2, n = b.shape
    assert k == k2, (a.shape, b.shape)
    has_bias = bias is not None

    # Rows: sublane multiple only (16 covers bf16 packing). Lanes: 128 multiples.
    tm = min(_round_up(m, 16), _TM_CAP)
    tk = min(_round_up(k, 128), _TK_CAP)
    tn = min(_round_up(n, 128), _TN_CAP)
    mp, kp, np_ = _round_up(m, tm), _round_up(k, tk), _round_up(n, tn)

    a_p = _pad2(a.astype(compute_dtype), (mp, kp))
    b_p = _pad2(b.astype(compute_dtype), (kp, np_))
    inputs = [a_p, b_p]
    single_k = (kp == tk)

    if single_k:
        grid = (mp // tm, np_ // tn)
        in_specs = [pl.BlockSpec((tm, tk), lambda i, j: (i, 0)),
                    pl.BlockSpec((tk, tn), lambda i, j: (0, j))]
        if has_bias:
            bias_p = _pad2(jnp.asarray(bias, jnp.float32).reshape(1, n), (1, np_))
            inputs.append(bias_p)
            in_specs.append(pl.BlockSpec((1, tn), lambda i, j: (0, j)))
        out_specs = pl.BlockSpec((tm, tn), lambda i, j: (i, j))
        kernel = functools.partial(_mm_kernel_single_k, relu=relu,
                                   has_bias=has_bias)
        scratch = []
        dims = ("parallel", "parallel")
    else:
        grid = (mp // tm, np_ // tn, kp // tk)
        in_specs = [pl.BlockSpec((tm, tk), lambda i, j, kk: (i, kk)),
                    pl.BlockSpec((tk, tn), lambda i, j, kk: (kk, j))]
        if has_bias:
            bias_p = _pad2(jnp.asarray(bias, jnp.float32).reshape(1, n), (1, np_))
            inputs.append(bias_p)
            in_specs.append(pl.BlockSpec((1, tn), lambda i, j, kk: (0, j)))
        out_specs = pl.BlockSpec((tm, tn), lambda i, j, kk: (i, j))
        kernel = functools.partial(_mm_kernel_multi_k, relu=relu,
                                   has_bias=has_bias)
        scratch = [pltpu.VMEM((tm, tn), jnp.float32)]
        dims = ("parallel", "parallel", "arbitrary")

    out = pl.pallas_call(
        kernel,
        out_shape=jax.ShapeDtypeStruct((mp, np_), out_dtype),
        grid_spec=pltpu.PrefetchScalarGridSpec(
            num_scalar_prefetch=0, grid=grid,
            in_specs=in_specs, out_specs=out_specs, scratch_shapes=scratch),
        compiler_params=pltpu.CompilerParams(
            dimension_semantics=dims, vmem_limit_bytes=_VMEM_LIMIT),
    )(*inputs)
    return out[:m, :n]


# ---------------------------------------------------------------------------
# Tiling helpers for the large path.
# ---------------------------------------------------------------------------
def _choose_row_tiling(n, cap=_TM_CAP):
    if n >= 4 * cap:
        # Large graphs: 256-row tiles (good MXU width on v6e/v7x); the <256-row
        # padding waste is negligible at this size.
        np_ = _round_up(n, cap)
        return np_, cap
    np_ = _round_up(n, 16)          # sublane-only padding for small/medium N
    for t in (256, 128, 64, 32, 16):
        if t <= cap and np_ % t == 0:
            return np_, t
    return np_, 16


def _choose_col_tile(hp, cap=_TN_CAP):
    for t in (512, 384, 256, 128):
        if t <= cap and hp % t == 0:
            return t
    return 128


# ---------------------------------------------------------------------------
# Forward passes.
# ---------------------------------------------------------------------------
def _forward_general(params, x, a_hat, *, compute_dtype=jnp.bfloat16):
    """Large-problem path: one fused pallas_call per GCN layer + one matmul."""
    n, f = x.shape
    np_, tm = _choose_row_tiling(n)
    # Pre-cast + pre-pad A_hat ONCE, outside the layer loop (bf16 halves the
    # HBM bytes of the bandwidth-bound A_hat stage).
    a_p = _pad2(a_hat.astype(compute_dtype), (np_, np_))
    h = _pad2(x.astype(compute_dtype), (np_, _round_up(f, 128)))

    for w, b in params["gcn"]:
        fout = w.shape[1]
        fp, hp = h.shape[1], _round_up(fout, 128)
        w_p = _pad2(w.astype(compute_dtype), (fp, hp))
        b_p = _pad2(jnp.asarray(b, jnp.float32).reshape(1, fout), (1, hp))
        tn = _choose_col_tile(hp)
        if _layer_fused_fits(np_, fp, hp, tm, tn):
            h = gcn_layer_fused(a_p, h, w_p, b_p, tm=tm, tn=tn,
                                out_dtype=compute_dtype)
        else:
            # Fallback: staged X@W through HBM when the resident-XW slab would
            # exceed the VMEM budget (relevant on v7x's smaller VMEM).
            xw = pallas_matmul(h, w_p, relu=False, out_dtype=compute_dtype,
                               compute_dtype=compute_dtype)
            h = pallas_matmul(a_p, xw, bias=b_p, relu=True,
                              out_dtype=compute_dtype,
                              compute_dtype=compute_dtype)

    # F.dropout(p=0.5, training=False) == identity in eval mode.
    w_lin, b_lin = params["linear"]
    c = w_lin.shape[1]
    w_lin_p = _pad2(w_lin.astype(jnp.float32), (h.shape[1], c))
    out = pallas_matmul(h, w_lin_p, bias=b_lin, relu=False,
                        out_dtype=jnp.float32, compute_dtype=compute_dtype)
    return out[:n, :c]


def gat_forward(params, x, a_hat, *, force_general=False):
    n, f = x.shape
    hidden = [w.shape[1] for w, _ in params["gcn"]]
    c = params["linear"][0].shape[1]
    if (not force_general) and _fused_forward_fits(n, f, hidden, c):
        return _forward_fused_whole(params, x, a_hat)
    return _forward_general(params, x, a_hat)


def _forward_reference(params, x, a_hat):
    """Pure-JAX reference (no Pallas) for tolerance checking."""
    h = x
    for w, b in params["gcn"]:
        h = jnp.maximum(a_hat @ (h @ w) + b, 0.0)
    w_lin, b_lin = params["linear"]
    return h @ w_lin + b_lin


# ---------------------------------------------------------------------------
# Glue (plain JAX): adjacency normalization and parameter construction.
# ---------------------------------------------------------------------------
def normalized_adjacency(edge_index, num_nodes):
    """Dense D^{-1/2}(A + I)D^{-1/2}, matching PyG GCNConv gcn_norm
    (existing self loops dropped, exactly one self loop added per node)."""
    src, dst = edge_index[0], edge_index[1]
    not_self = (src != dst).astype(jnp.float32)
    a = jnp.zeros((num_nodes, num_nodes), dtype=jnp.float32)
    a = a.at[dst, src].add(not_self)                  # message: src -> dst
    a = a + jnp.eye(num_nodes, dtype=jnp.float32)
    deg = jnp.sum(a, axis=1)
    d_inv_sqrt = jnp.where(deg > 0.0, jax.lax.rsqrt(deg), 0.0)
    return a * d_inv_sqrt[:, None] * d_inv_sqrt[None, :]


def glorot(key, shape):
    limit = jnp.sqrt(6.0 / (shape[0] + shape[1]))
    return jax.random.uniform(key, shape, jnp.float32, -limit, limit)


def init_params(key, num_features, hidden_channels_list, num_classes):
    hns = [num_features] + list(hidden_channels_list)
    params = {"gcn": []}
    for idx in range(len(hidden_channels_list)):
        key, wk = jax.random.split(key)
        w = glorot(wk, (hns[idx], hns[idx + 1]))
        b = jnp.zeros((hns[idx + 1],), jnp.float32)   # GCNConv bias init = zeros
        params["gcn"].append((w, b))
    key, wk, bk = jax.random.split(key, 3)
    fan_in = hidden_channels_list[-1]
    bound = 1.0 / jnp.sqrt(fan_in)
    params["linear"] = (
        jax.random.uniform(wk, (fan_in, num_classes), jnp.float32, -bound, bound),
        jax.random.uniform(bk, (num_classes,), jnp.float32, -bound, bound),
    )
    return params


# ---------------------------------------------------------------------------
# Driver
# ---------------------------------------------------------------------------
if __name__ == "__main__":
    # NOTE: the reference module is named GAT but is a GCNConv stack (no
    # attention coefficients); we match the spec'd module semantics exactly.
    num_nodes = 16
    num_features = 8
    hidden_channels_list = [32, 16]
    num_classes = 4

    key = jax.random.PRNGKey(0)
    key, xk, pk = jax.random.split(key, 3)

    x = jax.random.normal(xk, (num_nodes, num_features), jnp.float32)

    # Deterministic undirected ring graph (both directions), shape (2, 2N).
    idx = jnp.arange(num_nodes, dtype=jnp.int32)
    nxt = (idx + 1) % num_nodes
    edge_index = jnp.concatenate(
        [jnp.stack([idx, nxt], axis=0), jnp.stack([nxt, idx], axis=0)], axis=1
    )

    params = init_params(pk, num_features, hidden_channels_list, num_classes)

    # A_hat is pure preprocessing: build once, outside the jitted forward.
    a_hat = normalized_adjacency(edge_index, num_nodes)

    # Primary path for this problem size: single fused pallas_call (f32).
    fwd = jax.jit(gat_forward)
    out = jax.block_until_ready(fwd(params, x, a_hat))
    assert out.shape == (num_nodes, num_classes)
    assert bool(jnp.all(jnp.isfinite(out)))

    # Tolerance check against a pure-JAX reference.
    ref = _forward_reference(params, x, a_hat)
    assert bool(jnp.allclose(out, ref, rtol=2e-2, atol=2e-2)), "fused path mismatch"

    # Also exercise the large-problem (per-layer fused, bf16) path and check it.
    fwd_gen = jax.jit(functools.partial(gat_forward, force_general=True))
    out_gen = jax.block_until_ready(fwd_gen(params, x, a_hat))
    assert out_gen.shape == (num_nodes, num_classes)
    assert bool(jnp.allclose(out_gen, ref, rtol=5e-2, atol=5e-2)), "general path mismatch"

    print("KERNEL_OK")
</pallas_src>

<mosaic_0001>
module attributes {stable_mosaic.version = 11 : i64} {
  func.func @_fused_forward_kernel(%arg0: memref<16x16xf32, #tpu.memory_space<vmem>>, %arg1: memref<16x128xf32, #tpu.memory_space<vmem>>, %arg2: memref<128x128xf32, #tpu.memory_space<vmem>>, %arg3: memref<1x128xf32, #tpu.memory_space<vmem>>, %arg4: memref<128x128xf32, #tpu.memory_space<vmem>>, %arg5: memref<1x128xf32, #tpu.memory_space<vmem>>, %arg6: memref<128x128xf32, #tpu.memory_space<vmem>>, %arg7: memref<1x128xf32, #tpu.memory_space<vmem>>, %arg8: memref<16x128xf32, #tpu.memory_space<vmem>>) attributes {dimension_semantics = [], scalar_prefetch = 0 : i64, scratch_operands = 0 : i64, tpu.core_type = #tpu.core_type<tc>} {
    %c0 = arith.constant 0 : index
    %c0_0 = arith.constant 0 : index
    %0 = vector.load %arg0[%c0, %c0_0] : memref<16x16xf32, #tpu.memory_space<vmem>>, vector<16x16xf32>
    %c0_1 = arith.constant 0 : index
    %c0_2 = arith.constant 0 : index
    %1 = vector.load %arg1[%c0_1, %c0_2] : memref<16x128xf32, #tpu.memory_space<vmem>>, vector<16x128xf32>
    %c0_3 = arith.constant 0 : index
    %c0_4 = arith.constant 0 : index
    %2 = vector.load %arg2[%c0_3, %c0_4] : memref<128x128xf32, #tpu.memory_space<vmem>>, vector<128x128xf32>
    %c0_5 = arith.constant 0 : index
    %c0_6 = arith.constant 0 : index
    %3 = vector.load %arg3[%c0_5, %c0_6] : memref<1x128xf32, #tpu.memory_space<vmem>>, vector<1x128xf32>
    %cst = arith.constant dense<0.000000e+00> : vector<16x128xf32>
    %4 = tpu.matmul %1, %2, %cst {dimension_numbers = #tpu.dot_dimension_numbers<[1], [0], [0], [1], [0, 0, 1, 1], [], []>} : vector<16x128xf32>, vector<128x128xf32>, vector<16x128xf32> -> vector<16x128xf32>
    %cst_7 = arith.constant dense<0.000000e+00> : vector<16x128xf32>
    %5 = tpu.matmul %0, %4, %cst_7 {dimension_numbers = #tpu.dot_dimension_numbers<[1], [0], [0], [1], [0, 0, 1, 1], [], []>} : vector<16x16xf32>, vector<16x128xf32>, vector<16x128xf32> -> vector<16x128xf32>
    %6 = vector.broadcast %3 : vector<1x128xf32> to vector<16x128xf32>
    %7 = arith.addf %5, %6 : vector<16x128xf32>
    %cst_8 = arith.constant 0.000000e+00 : f32
    %8 = vector.broadcast %cst_8 : f32 to vector<16x128xf32>
    %9 = arith.maximumf %7, %8 : vector<16x128xf32>
    %c0_9 = arith.constant 0 : index
    %c0_10 = arith.constant 0 : index
    %10 = vector.load %arg4[%c0_9, %c0_10] : memref<128x128xf32, #tpu.memory_space<vmem>>, vector<128x128xf32>
    %c0_11 = arith.constant 0 : index
    %c0_12 = arith.constant 0 : index
    %11 = vector.load %arg5[%c0_11, %c0_12] : memref<1x128xf32, #tpu.memory_space<vmem>>, vector<1x128xf32>
    %cst_13 = arith.constant dense<0.000000e+00> : vector<16x128xf32>
    %12 = tpu.matmul %9, %10, %cst_13 {dimension_numbers = #tpu.dot_dimension_numbers<[1], [0], [0], [1], [0, 0, 1, 1], [], []>} : vector<16x128xf32>, vector<128x128xf32>, vector<16x128xf32> -> vector<16x128xf32>
    %cst_14 = arith.constant dense<0.000000e+00> : vector<16x128xf32>
    %13 = tpu.matmul %0, %12, %cst_14 {dimension_numbers = #tpu.dot_dimension_numbers<[1], [0], [0], [1], [0, 0, 1, 1], [], []>} : vector<16x16xf32>, vector<16x128xf32>, vector<16x128xf32> -> vector<16x128xf32>
    %14 = vector.broadcast %11 : vector<1x128xf32> to vector<16x128xf32>
    %15 = arith.addf %13, %14 : vector<16x128xf32>
    %cst_15 = arith.constant 0.000000e+00 : f32
    %16 = vector.broadcast %cst_15 : f32 to vector<16x128xf32>
    %17 = arith.maximumf %15, %16 : vector<16x128xf32>
    %c0_16 = arith.constant 0 : index
    %c0_17 = arith.constant 0 : index
    %18 = vector.load %arg6[%c0_16, %c0_17] : memref<128x128xf32, #tpu.memory_space<vmem>>, vector<128x128xf32>
    %cst_18 = arith.constant dense<0.000000e+00> : vector<16x128xf32>
    %19 = tpu.matmul %17, %18, %cst_18 {dimension_numbers = #tpu.dot_dimension_numbers<[1], [0], [0], [1], [0, 0, 1, 1], [], []>} : vector<16x128xf32>, vector<128x128xf32>, vector<16x128xf32> -> vector<16x128xf32>
    %c0_19 = arith.constant 0 : index
    %c0_20 = arith.constant 0 : index
    %20 = vector.load %arg7[%c0_19, %c0_20] : memref<1x128xf32, #tpu.memory_space<vmem>>, vector<1x128xf32>
    %21 = vector.broadcast %20 : vector<1x128xf32> to vector<16x128xf32>
    %22 = arith.addf %19, %21 : vector<16x128xf32>
    %c0_21 = arith.constant 0 : index
    %c0_22 = arith.constant 0 : index
    %23 = vector.load %arg8[%c0_21, %c0_22] : memref<16x128xf32, #tpu.memory_space<vmem>>, vector<16x128xf32>
    tpu.vector_store %arg8[%c0_21, %c0_22], %22 {strides = array<i32>} : memref<16x128xf32, #tpu.memory_space<vmem>>, vector<16x128xf32>,
    return
  }
}

</mosaic_0001>

<llo_original>
// kernel: gat_forward.1
$region0: #{gat_forward.1}
  #allocation0 [shape = 'u32[]', space=smem, size = 0x4, offset = 0x4, fixed_abs, tag = 'smem constant byte address 0x4 - core index']
  #allocation1 [shape = 'u32[144,128]{1,0:T(1,128)}', space=vmem, size = 0x12000, scoped, tag = 'internal scratch']
  %s0 = inlined_call_operand.vmem [shape: f32[16,16], index: 0, kind: input, shape index: {}]
  %s1 = inlined_call_operand.vmem [shape: f32[16,128], index: 1, kind: input, shape index: {}]
  %s2 = inlined_call_operand.vmem [shape: f32[128,128], index: 2, kind: input, shape index: {}]
  %s3 = inlined_call_operand.vmem [shape: f32[1,128], index: 3, kind: input, shape index: {}]
  %s4 = inlined_call_operand.vmem [shape: f32[128,128], index: 4, kind: input, shape index: {}]
  %s5 = inlined_call_operand.vmem [shape: f32[1,128], index: 5, kind: input, shape index: {}]
  %s6 = inlined_call_operand.vmem [shape: f32[128,128], index: 6, kind: input, shape index: {}]
  %s7 = inlined_call_operand.vmem [shape: f32[1,128], index: 7, kind: input, shape index: {}]
  %s8 = inlined_call_operand.vmem [shape: f32[16,128], index: 8, kind: output, shape index: {}]
  %s9 = sld [smem:[#allocation0]]
  $region42: #{gat_forward.1} parent=0
    _
  %s11 = ssub.s32 1, %s9
  %s12 = scalar_select 0, %s11, %s9
  // Predicated region
  $region2: #{gat_forward.1} parent=0 // pred_check
    _
  $region3: #{gat_forward.1} parent=0 // pred_check_branch
    %14 = sbr.rel (0) target = $region5
  $region4: #{gat_forward.1} parent=0 // pred_region
    _
  $region5: #{gat_forward.1} parent=0 // pred_fallthru
    _
  // Predicated region
  $region6: #{gat_forward.1} parent=0 // pred_check
    _
  $region7: #{gat_forward.1} parent=0 // pred_check_branch
    %16 = sbr.rel (0) target = $region9
  $region8: #{gat_forward.1} parent=0 // pred_region
    _
  $region9: #{gat_forward.1} parent=0 // pred_fallthru
    _
  // Predicated region
  $region10: #{gat_forward.1} parent=0 // pred_check
    _
  $region11: #{gat_forward.1} parent=0 // pred_check_branch
    %18 = sbr.rel (0) target = $region13
  $region12: #{gat_forward.1} parent=0 // pred_region
    _
  $region13: #{gat_forward.1} parent=0 // pred_fallthru
    _
  // Predicated region
  $region14: #{gat_forward.1} parent=0 // pred_check
    _
  $region15: #{gat_forward.1} parent=0 // pred_check_branch
    %20 = sbr.rel (0) target = $region17
  $region16: #{gat_forward.1} parent=0 // pred_region
    _
  $region17: #{gat_forward.1} parent=0 // pred_fallthru
    _
  // Predicated region
  $region18: #{gat_forward.1} parent=0 // pred_check
    _
  $region19: #{gat_forward.1} parent=0 // pred_check_branch
    %22 = sbr.rel (0) target = $region21
  $region20: #{gat_forward.1} parent=0 // pred_region
    _
  $region21: #{gat_forward.1} parent=0 // pred_fallthru
    _
  // Predicated region
  $region22: #{gat_forward.1} parent=0 // pred_check
    _
  $region23: #{gat_forward.1} parent=0 // pred_check_branch
    %24 = sbr.rel (0) target = $region25
  $region24: #{gat_forward.1} parent=0 // pred_region
    _
  $region25: #{gat_forward.1} parent=0 // pred_fallthru
    _
  // Predicated region
  $region26: #{gat_forward.1} parent=0 // pred_check
    _
  $region27: #{gat_forward.1} parent=0 // pred_check_branch
    %26 = sbr.rel (0) target = $region29
  $region28: #{gat_forward.1} parent=0 // pred_region
    _
  $region29: #{gat_forward.1} parent=0 // pred_fallthru
    _
  // Predicated region
  $region30: #{gat_forward.1} parent=0 // pred_check
    _
  $region31: #{gat_forward.1} parent=0 // pred_check_branch
    %28 = sbr.rel (0) target = $region33
  $region32: #{gat_forward.1} parent=0 // pred_region
    _
  $region33: #{gat_forward.1} parent=0 // pred_fallthru
    _
  %v29 = vld [vmem:[%s0] sm:$0xff]
  %v30 = vld [vmem:[%s0 + $0x8] sm:$0xff]
  %v31 = vld [vmem:[%s1] sm:$0xff]
  %v32 = vld [vmem:[%s1 + $0x8] sm:$0xff]
  %v33 = vld [vmem:[%s2] sm:$0xff]
  %v34 = vld [vmem:[%s2 + $0x8] sm:$0xff]
  %v35 = vld [vmem:[%s2 + $0x10] sm:$0xff]
  %v36 = vld [vmem:[%s2 + $0x18] sm:$0xff]
  %v37 = vld [vmem:[%s2 + $0x20] sm:$0xff]
  %v38 = vld [vmem:[%s2 + $0x28] sm:$0xff]
  %v39 = vld [vmem:[%s2 + $0x30] sm:$0xff]
  %v40 = vld [vmem:[%s2 + $0x38] sm:$0xff]
  %v41 = vld [vmem:[%s2 + $0x40] sm:$0xff]
  %v42 = vld [vmem:[%s2 + $0x48] sm:$0xff]
  %v43 = vld [vmem:[%s2 + $0x50] sm:$0xff]
  %v44 = vld [vmem:[%s2 + $0x58] sm:$0xff]
  %v45 = vld [vmem:[%s2 + $0x60] sm:$0xff]
  %v46 = vld [vmem:[%s2 + $0x68] sm:$0xff]
  %v47 = vld [vmem:[%s2 + $0x70] sm:$0xff]
  %v48 = vld [vmem:[%s2 + $0x78] sm:$0xff]
  %v49 = vld [vmem:[%s3] sm:$0x1]
  %50 = vmatprep.subr.mxu0 0.0
  %51 = vmatpush1.msra.mxu0 %v48
  %52 = vmatprep.subr.mxu0 0.0
  %53 = vmatpush1.msra.mxu0 %v47
  %54 = vmatprep.subr.mxu0 0.0
  %55 = vmatpush1.msra.mxu0 %v46
  %56 = vmatprep.subr.mxu0 0.0
  %57 = vmatpush1.msra.mxu0 %v45
  %58 = vmatprep.subr.mxu0 0.0
  %59 = vmatpush1.msra.mxu0 %v44
  %60 = vmatprep.subr.mxu0 0.0
  %61 = vmatpush1.msra.mxu0 %v43
  %62 = vmatprep.subr.mxu0 0.0
  %63 = vmatpush1.msra.mxu0 %v42
  %64 = vmatprep.subr.mxu0 0.0
  %65 = vmatpush1.msra.mxu0 %v41
  %66 = vmatprep.subr.mxu0 0.0
  %67 = vmatpush1.msra.mxu0 %v40
  %68 = vmatprep.subr.mxu0 0.0
  %69 = vmatpush1.msra.mxu0 %v39
  %70 = vmatprep.subr.mxu0 0.0
  %71 = vmatpush1.msra.mxu0 %v38
  %72 = vmatprep.subr.mxu0 0.0
  %73 = vmatpush1.msra.mxu0 %v37
  %74 = vmatprep.subr.mxu0 0.0
  %75 = vmatpush1.msra.mxu0 %v36
  %76 = vmatprep.subr.mxu0 0.0
  %77 = vmatpush1.msra.mxu0 %v35
  %78 = vmatprep.subr.mxu0 0.0
  %79 = vmatpush1.msra.mxu0 %v34
  %80 = vmatprep.subr.mxu0 0.0
  %81 = vmatpush1.msra.mxu0 %v33
  %82 = vmatprep.subr.mxu0 0.0
  %83 = vmatpush2.msra.mxu0 0.0
  %84 = vmatprep.subr.mxu0 0.0
  %85 = vmatpush2.msra.mxu0 0.0
  %86 = vmatprep.subr.mxu0 0.0
  %87 = vmatpush2.msra.mxu0 0.0
  %88 = vmatprep.subr.mxu0 0.0
  %89 = vmatpush2.msra.mxu0 0.0
  %90 = vmatprep.subr.mxu0 0.0
  %91 = vmatpush2.msra.mxu0 0.0
  %92 = vmatprep.subr.mxu0 0.0
  %93 = vmatpush2.msra.mxu0 0.0
  %94 = vmatprep.subr.mxu0 0.0
  %95 = vmatpush2.msra.mxu0 0.0
  %96 = vmatprep.subr.mxu0 0.0
  %97 = vmatpush2.msra.mxu0 0.0
  %98 = vmatprep.subr.mxu0 0.0
  %99 = vmatpush2.msra.mxu0 0.0
  %100 = vmatprep.subr.mxu0 0.0
  %101 = vmatpush2.msra.mxu0 0.0
  %102 = vmatprep.subr.mxu0 0.0
  %103 = vmatpush2.msra.mxu0 0.0
  %104 = vmatprep.subr.mxu0 0.0
  %105 = vmatpush2.msra.mxu0 0.0
  %106 = vmatprep.subr.mxu0 0.0
  %107 = vmatpush2.msra.mxu0 0.0
  %108 = vmatprep.subr.mxu0 0.0
  %109 = vmatpush2.msra.mxu0 0.0
  %110 = vmatprep.subr.mxu0 0.0
  %111 = vmatpush2.msra.mxu0 0.0
  %112 = vmatprep.subr.mxu0 0.0
  %113 = vmatpush2.msra.mxu0 0.0
  %114 = vmatprep.mubr.f32.mxu0 0.0
  %115 = vmatmul.mubr.f32.gmra.mxu0 %v31
  %v116 = vpop.f32.mrf.mxu0
  %v117 = vadd.f32 0.0, %v116
  %v118 = vpop.f32.mrf.mxu0
  %119 = vmatprep.mubr.f32.mxu0 0.0
  %120 = vmatmul.mubr.f32.gmra.mxu0 %v32
  %v121 = vpop.f32.mrf.mxu0
  %v122 = vadd.f32 0.0, %v121
  %v123 = vpop.f32.mrf.mxu0
  %124 = vdwg.mxu0
  %v126 = vlaneseq
  %v127 = vshrl.u32 %v126, 7
  %v128 = vsub.s32 0, %v127
  %v129 = vrot.slane %v49, %v128
  %vm131 = vcmask 130048
  %v133 = vsel %vm131, %v29, 0
  %v136 = vsel %vm131, %v30, 0
  %138 = vmatprep.subr.mxu0 0.0
  %139 = vmatpush1.msra.mxu0 0.0
  %140 = vmatprep.subr.mxu0 0.0
  %141 = vmatpush1.msra.mxu0 0.0
  %142 = vmatprep.subr.mxu0 0.0
  %143 = vmatpush1.msra.mxu0 0.0
  %144 = vmatprep.subr.mxu0 0.0
  %145 = vmatpush1.msra.mxu0 0.0
  %146 = vmatprep.subr.mxu0 0.0
  %147 = vmatpush1.msra.mxu0 0.0
  %148 = vmatprep.subr.mxu0 0.0
  %149 = vmatpush1.msra.mxu0 0.0
  %150 = vmatprep.subr.mxu0 0.0
  %151 = vmatpush1.msra.mxu0 0.0
  %152 = vmatprep.subr.mxu0 0.0
  %153 = vmatpush1.msra.mxu0 0.0
  %154 = vmatprep.subr.mxu0 0.0
  %155 = vmatpush1.msra.mxu0 0.0
  %156 = vmatprep.subr.mxu0 0.0
  %157 = vmatpush1.msra.mxu0 0.0
  %158 = vmatprep.subr.mxu0 0.0
  %159 = vmatpush1.msra.mxu0 0.0
  %160 = vmatprep.subr.mxu0 0.0
  %161 = vmatpush1.msra.mxu0 0.0
  %162 = vmatprep.subr.mxu0 0.0
  %163 = vmatpush1.msra.mxu0 0.0
  %164 = vmatprep.subr.mxu0 0.0
  %165 = vmatpush1.msra.mxu0 0.0
  %166 = vmatprep.subr.mxu0 0.0
  %167 = vmatpush1.msra.mxu0 %v122
  %168 = vmatprep.subr.mxu0 0.0
  %169 = vmatpush1.msra.mxu0 %v117
  %170 = vmatprep.subr.mxu0 0.0
  %171 = vmatpush2.msra.mxu0 0.0
  %172 = vmatprep.subr.mxu0 0.0
  %173 = vmatpush2.msra.mxu0 0.0
  %174 = vmatprep.subr.mxu0 0.0
  %175 = vmatpush2.msra.mxu0 0.0
  %176 = vmatprep.subr.mxu0 0.0
  %177 = vmatpush2.msra.mxu0 0.0
  %178 = vmatprep.subr.mxu0 0.0
  %179 = vmatpush2.msra.mxu0 0.0
  %180 = vmatprep.subr.mxu0 0.0
  %181 = vmatpush2.msra.mxu0 0.0
  %182 = vmatprep.subr.mxu0 0.0
  %183 = vmatpush2.msra.mxu0 0.0
  %184 = vmatprep.subr.mxu0 0.0
  %185 = vmatpush2.msra.mxu0 0.0
  %186 = vmatprep.subr.mxu0 0.0
  %187 = vmatpush2.msra.mxu0 0.0
  %188 = vmatprep.subr.mxu0 0.0
  %189 = vmatpush2.msra.mxu0 0.0
  %190 = vmatprep.subr.mxu0 0.0
  %191 = vmatpush2.msra.mxu0 0.0
  %192 = vmatprep.subr.mxu0 0.0
  %193 = vmatpush2.msra.mxu0 0.0
  %194 = vmatprep.subr.mxu0 0.0
  %195 = vmatpush2.msra.mxu0 0.0
  %196 = vmatprep.subr.mxu0 0.0
  %197 = vmatpush2.msra.mxu0 0.0
  %198 = vmatprep.subr.mxu0 0.0
  %199 = vmatpush2.msra.mxu0 0.0
  %200 = vmatprep.subr.mxu0 0.0
  %201 = vmatpush2.msra.mxu0 0.0
  %202 = vmatprep.mubr.f32.mxu0 0.0
  %203 = vmatmul.mubr.f32.gmra.mxu0 %v133
  %v204 = vpop.f32.mrf.mxu0
  %v205 = vadd.f32 %v129, %v204
  %v206 = vpop.f32.mrf.mxu0
  %207 = vmatprep.mubr.f32.mxu0 0.0
  %208 = vmatmul.mubr.f32.gmra.mxu0 %v136
  %v209 = vpop.f32.mrf.mxu0
  %v210 = vadd.f32 %v129, %v209
  %v211 = vpop.f32.mrf.mxu0
  %212 = vdwg.mxu0
  %v213 = vmax.f32 %v205, 0.0
  %v214 = vmax.f32 %v210, 0.0
  %v215 = vld [vmem:[%s4] sm:$0xff]
  %v216 = vld [vmem:[%s4 + $0x8] sm:$0xff]
  %v217 = vld [vmem:[%s4 + $0x10] sm:$0xff]
  %v218 = vld [vmem:[%s4 + $0x18] sm:$0xff]
  %v219 = vld [vmem:[%s4 + $0x20] sm:$0xff]
  %v220 = vld [vmem:[%s4 + $0x28] sm:$0xff]
  %v221 = vld [vmem:[%s4 + $0x30] sm:$0xff]
  %v222 = vld [vmem:[%s4 + $0x38] sm:$0xff]
  %v223 = vld [vmem:[%s4 + $0x40] sm:$0xff]
  %v224 = vld [vmem:[%s4 + $0x48] sm:$0xff]
  %v225 = vld [vmem:[%s4 + $0x50] sm:$0xff]
  %v226 = vld [vmem:[%s4 + $0x58] sm:$0xff]
  %v227 = vld [vmem:[%s4 + $0x60] sm:$0xff]
  %v228 = vld [vmem:[%s4 + $0x68] sm:$0xff]
  %v229 = vld [vmem:[%s4 + $0x70] sm:$0xff]
  %v230 = vld [vmem:[%s4 + $0x78] sm:$0xff]
  %v231 = vld [vmem:[%s5] sm:$0x1]
  %232 = vmatprep.subr.mxu0 0.0
  %233 = vmatpush1.msra.mxu0 %v230
  %234 = vmatprep.subr.mxu0 0.0
  %235 = vmatpush1.msra.mxu0 %v229
  %236 = vmatprep.subr.mxu0 0.0
  %237 = vmatpush1.msra.mxu0 %v228
  %238 = vmatprep.subr.mxu0 0.0
  %239 = vmatpush1.msra.mxu0 %v227
  %240 = vmatprep.subr.mxu0 0.0
  %241 = vmatpush1.msra.mxu0 %v226
  %242 = vmatprep.subr.mxu0 0.0
  %243 = vmatpush1.msra.mxu0 %v225
  %244 = vmatprep.subr.mxu0 0.0
  %245 = vmatpush1.msra.mxu0 %v224
  %246 = vmatprep.subr.mxu0 0.0
  %247 = vmatpush1.msra.mxu0 %v223
  %248 = vmatprep.subr.mxu0 0.0
  %249 = vmatpush1.msra.mxu0 %v222
  %250 = vmatprep.subr.mxu0 0.0
  %251 = vmatpush1.msra.mxu0 %v221
  %252 = vmatprep.subr.mxu0 0.0
  %253 = vmatpush1.msra.mxu0 %v220
  %254 = vmatprep.subr.mxu0 0.0
  %255 = vmatpush1.msra.mxu0 %v219
  %256 = vmatprep.subr.mxu0 0.0
  %257 = vmatpush1.msra.mxu0 %v218
  %258 = vmatprep.subr.mxu0 0.0
  %259 = vmatpush1.msra.mxu0 %v217
  %260 = vmatprep.subr.mxu0 0.0
  %261 = vmatpush1.msra.mxu0 %v216
  %262 = vmatprep.subr.mxu0 0.0
  %263 = vmatpush1.msra.mxu0 %v215
  %264 = vmatprep.subr.mxu0 0.0
  %265 = vmatpush2.msra.mxu0 0.0
  %266 = vmatprep.subr.mxu0 0.0
  %267 = vmatpush2.msra.mxu0 0.0
  %268 = vmatprep.subr.mxu0 0.0
  %269 = vmatpush2.msra.mxu0 0.0
  %270 = vmatprep.subr.mxu0 0.0
  %271 = vmatpush2.msra.mxu0 0.0
  %272 = vmatprep.subr.mxu0 0.0
  %273 = vmatpush2.msra.mxu0 0.0
  %274 = vmatprep.subr.mxu0 0.0
  %275 = vmatpush2.msra.mxu0 0.0
  %276 = vmatprep.subr.mxu0 0.0
  %277 = vmatpush2.msra.mxu0 0.0
  %278 = vmatprep.subr.mxu0 0.0
  %279 = vmatpush2.msra.mxu0 0.0
  %280 = vmatprep.subr.mxu0 0.0
  %281 = vmatpush2.msra.mxu0 0.0
  %282 = vmatprep.subr.mxu0 0.0
  %283 = vmatpush2.msra.mxu0 0.0
  %284 = vmatprep.subr.mxu0 0.0
  %285 = vmatpush2.msra.mxu0 0.0
  %286 = vmatprep.subr.mxu0 0.0
  %287 = vmatpush2.msra.mxu0 0.0
  %288 = vmatprep.subr.mxu0 0.0
  %289 = vmatpush2.msra.mxu0 0.0
  %290 = vmatprep.subr.mxu0 0.0
  %291 = vmatpush2.msra.mxu0 0.0
  %292 = vmatprep.subr.mxu0 0.0
  %293 = vmatpush2.msra.mxu0 0.0
  %294 = vmatprep.subr.mxu0 0.0
  %295 = vmatpush2.msra.mxu0 0.0
  %296 = vmatprep.mubr.f32.mxu0 0.0
  %297 = vmatmul.mubr.f32.gmra.mxu0 %v213
  %v298 = vpop.f32.mrf.mxu0
  %v299 = vadd.f32 0.0, %v298
  %v300 = vpop.f32.mrf.mxu0
  %301 = vmatprep.mubr.f32.mxu0 0.0
  %302 = vmatmul.mubr.f32.gmra.mxu0 %v214
  %v303 = vpop.f32.mrf.mxu0
  %v304 = vadd.f32 0.0, %v303
  %v305 = vpop.f32.mrf.mxu0
  %306 = vdwg.mxu0
  %v308 = vlaneseq
  %v309 = vshrl.u32 %v308, 7
  %v310 = vsub.s32 0, %v309
  %v311 = vrot.slane %v231, %v310
  %313 = vmatprep.subr.mxu0 0.0
  %314 = vmatpush1.msra.mxu0 0.0
  %315 = vmatprep.subr.mxu0 0.0
  %316 = vmatpush1.msra.mxu0 0.0
  %317 = vmatprep.subr.mxu0 0.0
  %318 = vmatpush1.msra.mxu0 0.0
  %319 = vmatprep.subr.mxu0 0.0
  %320 = vmatpush1.msra.mxu0 0.0
  %321 = vmatprep.subr.mxu0 0.0
  %322 = vmatpush1.msra.mxu0 0.0
  %323 = vmatprep.subr.mxu0 0.0
  %324 = vmatpush1.msra.mxu0 0.0
  %325 = vmatprep.subr.mxu0 0.0
  %326 = vmatpush1.msra.mxu0 0.0
  %327 = vmatprep.subr.mxu0 0.0
  %328 = vmatpush1.msra.mxu0 0.0
  %329 = vmatprep.subr.mxu0 0.0
  %330 = vmatpush1.msra.mxu0 0.0
  %331 = vmatprep.subr.mxu0 0.0
  %332 = vmatpush1.msra.mxu0 0.0
  %333 = vmatprep.subr.mxu0 0.0
  %334 = vmatpush1.msra.mxu0 0.0
  %335 = vmatprep.subr.mxu0 0.0
  %336 = vmatpush1.msra.mxu0 0.0
  %337 = vmatprep.subr.mxu0 0.0
  %338 = vmatpush1.msra.mxu0 0.0
  %339 = vmatprep.subr.mxu0 0.0
  %340 = vmatpush1.msra.mxu0 0.0
  %341 = vmatprep.subr.mxu0 0.0
  %342 = vmatpush1.msra.mxu0 %v304
  %343 = vmatprep.subr.mxu0 0.0
  %344 = vmatpush1.msra.mxu0 %v299
  %345 = vmatprep.subr.mxu0 0.0
  %346 = vmatpush2.msra.mxu0 0.0
  %347 = vmatprep.subr.mxu0 0.0
  %348 = vmatpush2.msra.mxu0 0.0
  %349 = vmatprep.subr.mxu0 0.0
  %350 = vmatpush2.msra.mxu0 0.0
  %351 = vmatprep.subr.mxu0 0.0
  %352 = vmatpush2.msra.mxu0 0.0
  %353 = vmatprep.subr.mxu0 0.0
  %354 = vmatpush2.msra.mxu0 0.0
  %355 = vmatprep.subr.mxu0 0.0
  %356 = vmatpush2.msra.mxu0 0.0
  %357 = vmatprep.subr.mxu0 0.0
  %358 = vmatpush2.msra.mxu0 0.0
  %359 = vmatprep.subr.mxu0 0.0
  %360 = vmatpush2.msra.mxu0 0.0
  %361 = vmatprep.subr.mxu0 0.0
  %362 = vmatpush2.msra.mxu0 0.0
  %363 = vmatprep.subr.mxu0 0.0
  %364 = vmatpush2.msra.mxu0 0.0
  %365 = vmatprep.subr.mxu0 0.0
  %366 = vmatpush2.msra.mxu0 0.0
  %367 = vmatprep.subr.mxu0 0.0
  %368 = vmatpush2.msra.mxu0 0.0
  %369 = vmatprep.subr.mxu0 0.0
  %370 = vmatpush2.msra.mxu0 0.0
  %371 = vmatprep.subr.mxu0 0.0
  %372 = vmatpush2.msra.mxu0 0.0
  %373 = vmatprep.subr.mxu0 0.0
  %374 = vmatpush2.msra.mxu0 0.0
  %375 = vmatprep.subr.mxu0 0.0
  %376 = vmatpush2.msra.mxu0 0.0
  %377 = vmatprep.mubr.f32.mxu0 0.0
  %378 = vmatmul.mubr.f32.gmra.mxu0 %v133
  %v379 = vpop.f32.mrf.mxu0
  %v380 = vadd.f32 %v311, %v379
  %v381 = vpop.f32.mrf.mxu0
  %382 = vmatprep.mubr.f32.mxu0 0.0
  %383 = vmatmul.mubr.f32.gmra.mxu0 %v136
  %v384 = vpop.f32.mrf.mxu0
  %v385 = vadd.f32 %v311, %v384
  %v386 = vpop.f32.mrf.mxu0
  %387 = vdwg.mxu0
  %v388 = vmax.f32 %v380, 0.0
  %v389 = vmax.f32 %v385, 0.0
  %v390 = vld [vmem:[%s6] sm:$0xff]
  %v391 = vld [vmem:[%s6 + $0x8] sm:$0xff]
  %v392 = vld [vmem:[%s6 + $0x10] sm:$0xff]
  %v393 = vld [vmem:[%s6 + $0x18] sm:$0xff]
  %v394 = vld [vmem:[%s6 + $0x20] sm:$0xff]
  %v395 = vld [vmem:[%s6 + $0x28] sm:$0xff]
  %v396 = vld [vmem:[%s6 + $0x30] sm:$0xff]
  %v397 = vld [vmem:[%s6 + $0x38] sm:$0xff]
  %v398 = vld [vmem:[%s6 + $0x40] sm:$0xff]
  %v399 = vld [vmem:[%s6 + $0x48] sm:$0xff]
  %v400 = vld [vmem:[%s6 + $0x50] sm:$0xff]
  %v401 = vld [vmem:[%s6 + $0x58] sm:$0xff]
  %v402 = vld [vmem:[%s6 + $0x60] sm:$0xff]
  %v403 = vld [vmem:[%s6 + $0x68] sm:$0xff]
  %v404 = vld [vmem:[%s6 + $0x70] sm:$0xff]
  %v405 = vld [vmem:[%s6 + $0x78] sm:$0xff]
  %v406 = vld [vmem:[%s7] sm:$0x1]
  %v408 = vlaneseq
  %v409 = vshrl.u32 %v408, 7
  %v410 = vsub.s32 0, %v409
  %v411 = vrot.slane %v406, %v410
  %413 = vmatprep.subr.mxu0 0.0
  %414 = vmatpush1.msra.mxu0 %v405
  %415 = vmatprep.subr.mxu0 0.0
  %416 = vmatpush1.msra.mxu0 %v404
  %417 = vmatprep.subr.mxu0 0.0
  %418 = vmatpush1.msra.mxu0 %v403
  %419 = vmatprep.subr.mxu0 0.0
  %420 = vmatpush1.msra.mxu0 %v402
  %421 = vmatprep.subr.mxu0 0.0
  %422 = vmatpush1.msra.mxu0 %v401
  %423 = vmatprep.subr.mxu0 0.0
  %424 = vmatpush1.msra.mxu0 %v400
  %425 = vmatprep.subr.mxu0 0.0
  %426 = vmatpush1.msra.mxu0 %v399
  %427 = vmatprep.subr.mxu0 0.0
  %428 = vmatpush1.msra.mxu0 %v398
  %429 = vmatprep.subr.mxu0 0.0
  %430 = vmatpush1.msra.mxu0 %v397
  %431 = vmatprep.subr.mxu0 0.0
  %432 = vmatpush1.msra.mxu0 %v396
  %433 = vmatprep.subr.mxu0 0.0
  %434 = vmatpush1.msra.mxu0 %v395
  %435 = vmatprep.subr.mxu0 0.0
  %436 = vmatpush1.msra.mxu0 %v394
  %437 = vmatprep.subr.mxu0 0.0
  %438 = vmatpush1.msra.mxu0 %v393
  %439 = vmatprep.subr.mxu0 0.0
  %440 = vmatpush1.msra.mxu0 %v392
  %441 = vmatprep.subr.mxu0 0.0
  %442 = vmatpush1.msra.mxu0 %v391
  %443 = vmatprep.subr.mxu0 0.0
  %444 = vmatpush1.msra.mxu0 %v390
  %445 = vmatprep.subr.mxu0 0.0
  %446 = vmatpush2.msra.mxu0 0.0
  %447 = vmatprep.subr.mxu0 0.0
  %448 = vmatpush2.msra.mxu0 0.0
  %449 = vmatprep.subr.mxu0 0.0
  %450 = vmatpush2.msra.mxu0 0.0
  %451 = vmatprep.subr.mxu0 0.0
  %452 = vmatpush2.msra.mxu0 0.0
  %453 = vmatprep.subr.mxu0 0.0
  %454 = vmatpush2.msra.mxu0 0.0
  %455 = vmatprep.subr.mxu0 0.0
  %456 = vmatpush2.msra.mxu0 0.0
  %457 = vmatprep.subr.mxu0 0.0
  %458 = vmatpush2.msra.mxu0 0.0
  %459 = vmatprep.subr.mxu0 0.0
  %460 = vmatpush2.msra.mxu0 0.0
  %461 = vmatprep.subr.mxu0 0.0
  %462 = vmatpush2.msra.mxu0 0.0
  %463 = vmatprep.subr.mxu0 0.0
  %464 = vmatpush2.msra.mxu0 0.0
  %465 = vmatprep.subr.mxu0 0.0
  %466 = vmatpush2.msra.mxu0 0.0
  %467 = vmatprep.subr.mxu0 0.0
  %468 = vmatpush2.msra.mxu0 0.0
  %469 = vmatprep.subr.mxu0 0.0
  %470 = vmatpush2.msra.mxu0 0.0
  %471 = vmatprep.subr.mxu0 0.0
  %472 = vmatpush2.msra.mxu0 0.0
  %473 = vmatprep.subr.mxu0 0.0
  %474 = vmatpush2.msra.mxu0 0.0
  %475 = vmatprep.subr.mxu0 0.0
  %476 = vmatpush2.msra.mxu0 0.0
  %477 = vmatprep.mubr.f32.mxu0 0.0
  %478 = vmatmul.mubr.f32.gmra.mxu0 %v388
  %v479 = vpop.f32.mrf.mxu0
  %v480 = vadd.f32 %v411, %v479
  %v481 = vpop.f32.mrf.mxu0
  %482 = vmatprep.mubr.f32.mxu0 0.0
  %483 = vmatmul.mubr.f32.gmra.mxu0 %v389
  %v484 = vpop.f32.mrf.mxu0
  %v485 = vadd.f32 %v411, %v484
  %v486 = vpop.f32.mrf.mxu0
  %487 = vdwg.mxu0
  %488 = vst [vmem:[%s8] sm:$0xff] %v480
  %489 = vst [vmem:[%s8 + $0x8] sm:$0xff] %v485
  // Predicated region
  $region34: #{gat_forward.1} parent=0 // pred_check
    _
  $region35: #{gat_forward.1} parent=0 // pred_check_branch
    %491 = sbr.rel (0) target = $region37
  $region36: #{gat_forward.1} parent=0 // pred_region
    _
  $region37: #{gat_forward.1} parent=0 // pred_fallthru
    _
  // Predicated region
  $region38: #{gat_forward.1} parent=0 // pred_check
    _
  $region39: #{gat_forward.1} parent=0 // pred_check_branch
    %493 = sbr.rel (0) target = $region41
  $region40: #{gat_forward.1} parent=0 // pred_region
    _
  $region41: #{gat_forward.1} parent=0 // pred_fallthru
    _

</llo_original>
